<compile_context>
chip_gen: v5e
topology: v5e:2x2
jax: 0.10.0
libtpu: 0.0.40
codegen_flags: <defaults>
</compile_context>

<pallas_src>
import functools
import math

import jax
import jax.numpy as jnp
from jax import lax
from jax.experimental import pallas as pl
from jax.experimental.pallas import tpu as pltpu


def _round_up(a, b):
    return (a + b - 1) // b * b


# ----------------------------- Pallas kernels ------------------------------

def _conv_stats_kernel(p_ref, w_ref, y_ref, sum_ref, sq_ref):
    """Conv-as-matmul on the MXU fused with per-tile BN batch statistics.

    p_ref  : (tr, Kd)   bf16 im2col patches; each dense row packs G output pixels.
    w_ref  : (Kd, L)    bf16 block-diagonal conv weight (resident in VMEM).
    y_ref  : (tr, L)    f32 pre-BN activations, lane-dense layout (L % 128 == 0).
    sum_ref/sq_ref : (8, L) f32 per-tile partial channel sum / sum-of-squares.
    """
    acc = jnp.dot(p_ref[...], w_ref[...], preferred_element_type=jnp.float32)
    y_ref[...] = acc
    # Per-tile partial stats. Column sums (1, L) are broadcast across the 8
    # sublanes and pre-scaled by 1/8 (exact in f32), so the host's final reduce
    # is just partial.sum(axis=0) over all rows of all tiles.
    s = jnp.sum(acc, axis=0, keepdims=True) * 0.125
    q = jnp.sum(acc * acc, axis=0, keepdims=True) * 0.125
    sum_ref[...] = jnp.broadcast_to(s, sum_ref.shape)
    sq_ref[...] = jnp.broadcast_to(q, sq_ref.shape)


def _bn_act_kernel(y_ref, mean_ref, msq_ref, gamma_ref, beta_ref, alpha_ref,
                   o_ref, *, eps, linear):
    """Fused BatchNorm apply (scale/shift derived in-kernel) + PReLU."""
    mean = mean_ref[...]
    var = jnp.maximum(msq_ref[...] - mean * mean, 0.0)   # clamp: cancellation safety
    scale = gamma_ref[...] * lax.rsqrt(var + eps)        # EUP rsqrt: hidden under DMA
    shift = beta_ref[...] - mean * scale
    y = y_ref[...] * scale + shift
    if not linear:
        y = jnp.where(y >= 0.0, y, alpha_ref[...] * y)
    o_ref[...] = y


# ------------------------------ Host wrapper -------------------------------

def _im2col(x_nhwc, k, s, p):
    """x_nhwc: (N, H, W, C) -> patches (N*OH*OW, k*k*C) in (dy, dx, c) column order."""
    N, H, W, C = x_nhwc.shape
    xp = jnp.pad(x_nhwc, ((0, 0), (p, p), (p, p), (0, 0)))
    OH = (H + 2 * p - k) // s + 1
    OW = (W + 2 * p - k) // s + 1
    cols = []
    for dy in range(k):
        for dx in range(k):
            cols.append(xp[:, dy:dy + s * OH:s, dx:dx + s * OW:s, :])  # (N,OH,OW,C)
    patches = jnp.stack(cols, axis=3).reshape(N * OH * OW, k * k * C)
    return patches, OH, OW


def conv_block_forward(x_nchw, conv_w, bn_gamma, bn_beta, prelu_alpha=None,
                       *, k, s, p, linear=False, eps=1e-5,
                       tile_rows=512, compute_dtype=jnp.bfloat16):
    """Forward of ConvBlock. x_nchw: (N, Cin, H, W) -> (N, OC, OH, OW)."""
    N, Cin, H, W = x_nchw.shape
    OC = conv_w.shape[0]
    KKC = k * k * Cin

    # Lane-dense grouping: pack G output pixels per dense row so the last dim
    # L = G*OC is a multiple of 128 -> unmasked, full-width vector stores.
    G = 128 // math.gcd(OC, 128)
    L = G * OC
    Kd = G * KKC

    x_nhwc = jnp.transpose(x_nchw, (0, 2, 3, 1)).astype(compute_dtype)
    patches, OH, OW = _im2col(x_nhwc, k, s, p)            # (M, KKC) in compute_dtype
    M = N * OH * OW

    # Pad M so the dense view tiles evenly. Zero patch rows -> zero y rows,
    # which contribute nothing to the channel sums (stats divide by real M).
    Md = pl.cdiv(M, G)
    tr = min(tile_rows, _round_up(Md, 8))                 # dense rows per tile (mult. of 8)
    Md_pad = _round_up(Md, tr)
    M_pad = Md_pad * G
    if M_pad != M:
        patches = jnp.pad(patches, ((0, M_pad - M), (0, 0)))
    patches_d = patches.reshape(Md_pad, Kd)               # free reshape (contiguous)

    # Conv weight (OC, Cin, k, k) -> (k*k*Cin, OC) matching patch column order,
    # then block-diagonal replicate G times so the matmul output is lane-dense.
    w_mat = jnp.transpose(conv_w, (2, 3, 1, 0)).reshape(KKC, OC).astype(jnp.float32)
    w_blk = jnp.kron(jnp.eye(G, dtype=jnp.float32), w_mat).astype(compute_dtype)

    n_tiles = Md_pad // tr

    # --- Kernel 1: conv matmul fused with per-tile BN batch statistics ------
    itemsize = jnp.dtype(compute_dtype).itemsize
    cost = pl.CostEstimate(
        flops=2 * Md_pad * Kd * L,
        transcendentals=0,
        bytes_accessed=(patches_d.size * itemsize + w_blk.size * itemsize
                        + Md_pad * L * 4 + 2 * n_tiles * 8 * L * 4),
    )
    y_d, psum, psq = pl.pallas_call(
        _conv_stats_kernel,
        out_shape=(
            jax.ShapeDtypeStruct((Md_pad, L), jnp.float32),
            jax.ShapeDtypeStruct((n_tiles * 8, L), jnp.float32),
            jax.ShapeDtypeStruct((n_tiles * 8, L), jnp.float32),
        ),
        grid=(n_tiles,),
        in_specs=[
            pl.BlockSpec((tr, Kd), lambda i: (i, 0)),
            pl.BlockSpec((Kd, L), lambda i: (0, 0)),      # resident weight
        ],
        out_specs=(
            pl.BlockSpec((tr, L), lambda i: (i, 0)),
            pl.BlockSpec((8, L), lambda i: (i, 0)),
            pl.BlockSpec((8, L), lambda i: (i, 0)),
        ),
        compiler_params=pltpu.CompilerParams(dimension_semantics=("parallel",)),
        cost_estimate=cost,
    )(patches_d, w_blk)

    # Tiny final reduction of per-tile partials (a few small XLA ops).
    ch_sum = psum.sum(axis=0).reshape(G, OC).sum(axis=0)  # (OC,)
    ch_sq = psq.sum(axis=0).reshape(G, OC).sum(axis=0)    # (OC,)
    inv_m = 1.0 / float(M)                                # real M, not padded
    mean_l = jnp.tile(ch_sum * inv_m, (G,)).reshape(1, L)
    msq_l = jnp.tile(ch_sq * inv_m, (G,)).reshape(1, L)
    gamma_l = jnp.tile(bn_gamma.astype(jnp.float32), (G,)).reshape(1, L)
    beta_l = jnp.tile(bn_beta.astype(jnp.float32), (G,)).reshape(1, L)
    if prelu_alpha is None:
        prelu_alpha = jnp.zeros((OC,), jnp.float32)
    alpha_l = jnp.tile(prelu_alpha.astype(jnp.float32), (G,)).reshape(1, L)

    # --- Kernel 2: fused BN scale/shift derivation + apply + PReLU ----------
    out_d = pl.pallas_call(
        functools.partial(_bn_act_kernel, eps=eps, linear=linear),
        out_shape=jax.ShapeDtypeStruct((Md_pad, L), jnp.float32),
        grid=(n_tiles,),
        in_specs=[
            pl.BlockSpec((tr, L), lambda i: (i, 0)),
            pl.BlockSpec((1, L), lambda i: (0, 0)),
            pl.BlockSpec((1, L), lambda i: (0, 0)),
            pl.BlockSpec((1, L), lambda i: (0, 0)),
            pl.BlockSpec((1, L), lambda i: (0, 0)),
            pl.BlockSpec((1, L), lambda i: (0, 0)),
        ],
        out_specs=pl.BlockSpec((tr, L), lambda i: (i, 0)),
        compiler_params=pltpu.CompilerParams(dimension_semantics=("parallel",)),
    )(y_d, mean_l, msq_l, gamma_l, beta_l, alpha_l)

    # Lane-dense (Md_pad, G*OC) -> (M, OC) is a free, contiguous reshape.
    out = out_d.reshape(M_pad, OC)[:M].reshape(N, OH, OW, OC)
    return jnp.transpose(out, (0, 3, 1, 2))


# ------------------------------- Reference ---------------------------------

def conv_block_reference(x_nchw, conv_w, bn_gamma, bn_beta, prelu_alpha,
                         *, k, s, p, linear=False, eps=1e-5,
                         compute_dtype=jnp.float32):
    # Round conv operands through compute_dtype so the check compares the
    # kernel against the same bf16-operand / f32-accumulate computation.
    xr = x_nchw.astype(compute_dtype).astype(jnp.float32)
    wr = conv_w.astype(compute_dtype).astype(jnp.float32)
    y = lax.conv_general_dilated(
        xr, wr, window_strides=(s, s), padding=[(p, p), (p, p)],
        dimension_numbers=("NCHW", "OIHW", "NCHW"))
    mean = jnp.mean(y, axis=(0, 2, 3), keepdims=True)
    var = jnp.mean((y - mean) ** 2, axis=(0, 2, 3), keepdims=True)
    y = (y - mean) * lax.rsqrt(var + eps)
    y = y * bn_gamma.reshape(1, -1, 1, 1) + bn_beta.reshape(1, -1, 1, 1)
    if linear:
        return y
    a = prelu_alpha.reshape(1, -1, 1, 1)
    return jnp.where(y >= 0.0, y, a * y)


# --------------------------------- Main -------------------------------------

if __name__ == "__main__":
    # ConvBlock(inp=4, oup=8, k=3, s=1, p=1, dw=False, linear=False)
    N, Cin, H, W = 2, 4, 16, 16
    OC, K, S, P = 8, 3, 1, 1
    linear = False

    key = jax.random.PRNGKey(0)
    k1, k2, k3, k4, k5 = jax.random.split(key, 5)

    x = jax.random.normal(k1, (N, Cin, H, W), dtype=jnp.float32)
    conv_w = jax.random.normal(k2, (OC, Cin, K, K), dtype=jnp.float32) * 0.1
    bn_gamma = 1.0 + 0.1 * jax.random.normal(k3, (OC,), dtype=jnp.float32)
    bn_beta = 0.1 * jax.random.normal(k4, (OC,), dtype=jnp.float32)
    prelu_alpha = jnp.full((OC,), 0.25, dtype=jnp.float32) + \
        0.05 * jax.random.normal(k5, (OC,), dtype=jnp.float32)

    out = conv_block_forward(x, conv_w, bn_gamma, bn_beta, prelu_alpha,
                             k=K, s=S, p=P, linear=linear,
                             compute_dtype=jnp.bfloat16)
    out = jax.block_until_ready(out)

    ref = conv_block_reference(x, conv_w, bn_gamma, bn_beta, prelu_alpha,
                               k=K, s=S, p=P, linear=linear,
                               compute_dtype=jnp.bfloat16)
    assert out.shape == (N, OC, H, W), out.shape
    max_err = jnp.max(jnp.abs(out - ref))
    assert jnp.allclose(out, ref, atol=1e-3, rtol=1e-3), f"max abs err {max_err}"

    print("KERNEL_OK")
</pallas_src>

<mosaic_0001>
module attributes {stable_mosaic.version = 11 : i64} {
  func.func @_conv_stats_kernel(%arg0: i32, %arg1: memref<32x576xbf16, #tpu.memory_space<vmem>>, %arg2: memref<576x128xbf16, #tpu.memory_space<vmem>>, %arg3: memref<32x128xf32, #tpu.memory_space<vmem>>, %arg4: memref<8x128xf32, #tpu.memory_space<vmem>>, %arg5: memref<8x128xf32, #tpu.memory_space<vmem>>) attributes {dimension_semantics = [#tpu.dimension_semantics<parallel>], iteration_bounds = array<i64: 1>, scalar_prefetch = 0 : i64, scratch_operands = 0 : i64, tpu.core_type = #tpu.core_type<tc>, window_params = [{transform_indices = @transform_0, window_bounds = array<i64: 32, 576>}, {pipeline_mode = #tpu.pipeline_mode<synchronous>, transform_indices = @transform_1, window_bounds = array<i64: 576, 128>}, {transform_indices = @transform_2, window_bounds = array<i64: 32, 128>}, {transform_indices = @transform_3, window_bounds = array<i64: 8, 128>}, {transform_indices = @transform_4, window_bounds = array<i64: 8, 128>}]} {
    %c0 = arith.constant 0 : index
    %c0_0 = arith.constant 0 : index
    %0 = vector.load %arg1[%c0, %c0_0] : memref<32x576xbf16, #tpu.memory_space<vmem>>, vector<32x576xbf16>
    %c0_1 = arith.constant 0 : index
    %c0_2 = arith.constant 0 : index
    %1 = vector.load %arg2[%c0_1, %c0_2] : memref<576x128xbf16, #tpu.memory_space<vmem>>, vector<576x128xbf16>
    %cst = arith.constant dense<0.000000e+00> : vector<32x128xf32>
    %2 = tpu.matmul %0, %1, %cst {dimension_numbers = #tpu.dot_dimension_numbers<[1], [0], [0], [1], [0, 0, 1, 1], [], []>} : vector<32x576xbf16>, vector<576x128xbf16>, vector<32x128xf32> -> vector<32x128xf32>
    %c0_3 = arith.constant 0 : index
    %c0_4 = arith.constant 0 : index
    %3 = vector.load %arg3[%c0_3, %c0_4] : memref<32x128xf32, #tpu.memory_space<vmem>>, vector<32x128xf32>
    tpu.vector_store %arg3[%c0_3, %c0_4], %2 {strides = array<i32>} : memref<32x128xf32, #tpu.memory_space<vmem>>, vector<32x128xf32>,
    %cst_5 = arith.constant dense<0.000000e+00> : vector<128xf32>
    %4 = vector.multi_reduction <add>, %2, %cst_5 [0] : vector<32x128xf32> to vector<128xf32>
    %5 = vector.shape_cast %4 : vector<128xf32> to vector<1x128xf32>
    %cst_6 = arith.constant 1.250000e-01 : f32
    %6 = vector.broadcast %cst_6 : f32 to vector<1x128xf32>
    %7 = arith.mulf %5, %6 : vector<1x128xf32>
    %8 = arith.mulf %2, %2 : vector<32x128xf32>
    %cst_7 = arith.constant dense<0.000000e+00> : vector<128xf32>
    %9 = vector.multi_reduction <add>, %8, %cst_7 [0] : vector<32x128xf32> to vector<128xf32>
    %10 = vector.shape_cast %9 : vector<128xf32> to vector<1x128xf32>
    %cst_8 = arith.constant 1.250000e-01 : f32
    %11 = vector.broadcast %cst_8 : f32 to vector<1x128xf32>
    %12 = arith.mulf %10, %11 : vector<1x128xf32>
    %13 = vector.shape_cast %7 : vector<1x128xf32> to vector<1x128xf32>
    %14 = vector.broadcast %13 : vector<1x128xf32> to vector<8x128xf32>
    %c0_9 = arith.constant 0 : index
    %c0_10 = arith.constant 0 : index
    %15 = vector.load %arg4[%c0_9, %c0_10] : memref<8x128xf32, #tpu.memory_space<vmem>>, vector<8x128xf32>
    tpu.vector_store %arg4[%c0_9, %c0_10], %14 {strides = array<i32>} : memref<8x128xf32, #tpu.memory_space<vmem>>, vector<8x128xf32>,
    %16 = vector.shape_cast %12 : vector<1x128xf32> to vector<1x128xf32>
    %17 = vector.broadcast %16 : vector<1x128xf32> to vector<8x128xf32>
    %c0_11 = arith.constant 0 : index
    %c0_12 = arith.constant 0 : index
    %18 = vector.load %arg5[%c0_11, %c0_12] : memref<8x128xf32, #tpu.memory_space<vmem>>, vector<8x128xf32>
    tpu.vector_store %arg5[%c0_11, %c0_12], %17 {strides = array<i32>} : memref<8x128xf32, #tpu.memory_space<vmem>>, vector<8x128xf32>,
    return
  }
  func.func @transform_0(%arg0: i32) -> (i32, i32) {
    %c0_i32 = arith.constant 0 : i32
    %c0_i32_0 = arith.constant 0 : i32
    return %arg0, %c0_i32 : i32, i32
  }
  func.func @transform_1(%arg0: i32) -> (i32, i32) {
    %c0_i32 = arith.constant 0 : i32
    %c0_i32_0 = arith.constant 0 : i32
    %c0_i32_1 = arith.constant 0 : i32
    return %c0_i32, %c0_i32_0 : i32, i32
  }
  func.func @transform_2(%arg0: i32) -> (i32, i32) {
    %c0_i32 = arith.constant 0 : i32
    %c0_i32_0 = arith.constant 0 : i32
    return %arg0, %c0_i32 : i32, i32
  }
  func.func @transform_3(%arg0: i32) -> (i32, i32) {
    %c0_i32 = arith.constant 0 : i32
    %c0_i32_0 = arith.constant 0 : i32
    return %arg0, %c0_i32 : i32, i32
  }
  func.func @transform_4(%arg0: i32) -> (i32, i32) {
    %c0_i32 = arith.constant 0 : i32
    %c0_i32_0 = arith.constant 0 : i32
    return %arg0, %c0_i32 : i32, i32
  }
}

</mosaic_0001>

<llo_original>
// kernel: tpu_custom_call.1
$region0: #{tpu_custom_call.1}
  #allocation0 [shape = 'u32[]', space=smem, size = 0x4, offset = 0x4, fixed_abs, tag = 'smem constant byte address 0x4 - core index']
  #allocation1 [shape = 'u32[72,128]{1,0:T(1,128)}', space=vmem, size = 0x9000, scoped, tag = 'internal scratch']
  %s0 = inlined_call_operand.hbm [shape: bf16[32,576], index: 0, kind: input, shape index: {}]
  %s1 = inlined_call_operand.hbm [shape: bf16[576,128], index: 1, kind: input, shape index: {}]
  %s2 = inlined_call_operand.hbm [shape: f32[32,128], index: 2, kind: output, shape index: {0}]
  %s3 = inlined_call_operand.hbm [shape: f32[8,128], index: 3, kind: output, shape index: {1}]
  %s4 = inlined_call_operand.hbm [shape: f32[8,128], index: 4, kind: output, shape index: {2}]
  %5 = xla_tuple %s2, %s3, %s4
  %s6 = sld [smem:[#allocation0]]
  $region42: #{tpu_custom_call.1} parent=0
    _
  %s8 = ssub.s32 1, %s6
  %s9 = scalar_select 0, %s8, %s6
  $region1: #{tpu_custom_call.1} parent=0
    #allocation2 [shape = 'u8[40960]{0}', space=vmem, size = 0xa000, scoped, tag = 'input window, operand 0, single buffered']
    #allocation3 [shape = 's32[1]{0}', space=sflag, size = 0x4, scoped, tag = 'scoped memory for tpu_custom_call.1']
    #allocation4 [shape = 's32[1]{0}', space=sflag, size = 0x4, scoped, tag = 'scoped memory for tpu_custom_call.1']
    #allocation5 [shape = 'u8[147456]{0}', space=vmem, size = 0x24000, scoped, tag = 'input window, operand 1, single buffered']
    #allocation6 [shape = 's32[1]{0}', space=sflag, size = 0x4, scoped, tag = 'scoped memory for tpu_custom_call.1']
    #allocation7 [shape = 'u8[16384]{0}', space=vmem, size = 0x4000, scoped, tag = 'output window, operand 0, single buffered']
    #allocation8 [shape = 'u8[4096]{0}', space=vmem, size = 0x1000, scoped, tag = 'output window, operand 1, single buffered']
    #allocation9 [shape = 's32[1]{0}', space=sflag, size = 0x4, scoped, tag = 'scoped memory for tpu_custom_call.1']
    #allocation10 [shape = 'u8[4096]{0}', space=vmem, size = 0x1000, scoped, tag = 'output window, operand 2, single buffered']
    %10 = vsyncpa [#allocation3], 0
    %11 = vsyncpa [#allocation6], 0
    %12 = vsyncpa [#allocation4], 0
    %13 = vsyncpa [#allocation9], 0
    // Predicated region
    $region2: #{tpu_custom_call.1} parent=1 // pred_check
      _
    $region3: #{tpu_custom_call.1} parent=1 // pred_check_branch
      %15 = sbr.rel (0) target = $region5
    $region4: #{tpu_custom_call.1} parent=1 // pred_region
      %17 = vsyncadd [#allocation3], 0
      %s18 = sshll.u32 %s0, 4
      %s19 = int_to_ptr.hbm [resolvable:$true] %s18
      %s20 = sshll.u32 [#allocation2], 4
      %s21 = int_to_ptr.vmem [resolvable:$true] %s20
      %26 = dma.hbm_to_vmem [thread:$0]  %s19, 1280, %s21, [#allocation3], 320, 320, 20
    $region5: #{tpu_custom_call.1} parent=1 // pred_fallthru
      _
    // Predicated region
    $region6: #{tpu_custom_call.1} parent=1 // pred_check
      _
    $region7: #{tpu_custom_call.1} parent=1 // pred_check_branch
      %28 = sbr.rel (0) target = $region9
    $region8: #{tpu_custom_call.1} parent=1 // pred_region
      %30 = vsyncadd [#allocation6], 0
      %s31 = sshll.u32 %s1, 4
      %s32 = int_to_ptr.hbm [resolvable:$true] %s31
      %s33 = sshll.u32 [#allocation5], 4
      %s34 = int_to_ptr.vmem [resolvable:$true] %s33
      %39 = dma.hbm_to_vmem [thread:$0]  %s32, 4608, %s34, [#allocation6], 64, 64, 4
    $region9: #{tpu_custom_call.1} parent=1 // pred_fallthru
      _
    // Predicated region
    $region10: #{tpu_custom_call.1} parent=1 // pred_check
      _
    $region11: #{tpu_custom_call.1} parent=1 // pred_check_branch
      %41 = sbr.rel (0) target = $region13
    $region12: #{tpu_custom_call.1} parent=1 // pred_region
      %43 = dma.done [#allocation3], 1280
    $region13: #{tpu_custom_call.1} parent=1 // pred_fallthru
      _
    // Predicated region
    $region14: #{tpu_custom_call.1} parent=1 // pred_check
      _
    $region15: #{tpu_custom_call.1} parent=1 // pred_check_branch
      %45 = sbr.rel (0) target = $region17
    $region16: #{tpu_custom_call.1} parent=1 // pred_region
      %47 = dma.done [#allocation6], 4608
    $region17: #{tpu_custom_call.1} parent=1 // pred_fallthru
      _
    %v49 = vld [vmem:[#allocation2] sm:$0xff]
    %v50 = vld [vmem:[#allocation2 + $0x8] sm:$0xff]
    %v51 = vld [vmem:[#allocation2 + $0x10] sm:$0xf]
    %v52 = vld [vmem:[#allocation2 + $0x14] sm:$0xff]
    %v53 = vld [vmem:[#allocation2 + $0x1c] sm:$0xff]
    %v54 = vld [vmem:[#allocation2 + $0x24] sm:$0xf]
    %v55 = vld [vmem:[#allocation2 + $0x28] sm:$0xff]
    %v56 = vld [vmem:[#allocation2 + $0x30] sm:$0xff]
    %v57 = vld [vmem:[#allocation2 + $0x38] sm:$0xf]
    %v58 = vld [vmem:[#allocation2 + $0x3c] sm:$0xff]
    %v59 = vld [vmem:[#allocation2 + $0x44] sm:$0xff]
    %v60 = vld [vmem:[#allocation2 + $0x4c] sm:$0xf]
    %v61 = vld [vmem:[#allocation5] sm:$0xf]
    %v62 = vld [vmem:[#allocation5 + $0x4] sm:$0xf]
    %v63 = vld [vmem:[#allocation5 + $0x8] sm:$0xf]
    %v64 = vld [vmem:[#allocation5 + $0xc] sm:$0xf]
    %v65 = vld [vmem:[#allocation5 + $0x10] sm:$0xf]
    %v66 = vld [vmem:[#allocation5 + $0x14] sm:$0xf]
    %v67 = vld [vmem:[#allocation5 + $0x18] sm:$0xf]
    %v68 = vld [vmem:[#allocation5 + $0x1c] sm:$0xf]
    %v69 = vld [vmem:[#allocation5 + $0x20] sm:$0xf]
    %v70 = vld [vmem:[#allocation5 + $0x24] sm:$0xf]
    %v71 = vld [vmem:[#allocation5 + $0x28] sm:$0xf]
    %v72 = vld [vmem:[#allocation5 + $0x2c] sm:$0xf]
    %v73 = vld [vmem:[#allocation5 + $0x30] sm:$0xf]
    %v74 = vld [vmem:[#allocation5 + $0x34] sm:$0xf]
    %v75 = vld [vmem:[#allocation5 + $0x38] sm:$0xf]
    %v76 = vld [vmem:[#allocation5 + $0x3c] sm:$0xf]
    %v77 = vld [vmem:[#allocation5 + $0x40] sm:$0xf]
    %v78 = vld [vmem:[#allocation5 + $0x44] sm:$0xf]
    %v79 = vld [vmem:[#allocation5 + $0x48] sm:$0xf]
    %v80 = vld [vmem:[#allocation5 + $0x4c] sm:$0xf]
    %v81 = vld [vmem:[#allocation5 + $0x50] sm:$0xf]
    %v82 = vld [vmem:[#allocation5 + $0x54] sm:$0xf]
    %v83 = vld [vmem:[#allocation5 + $0x58] sm:$0xf]
    %v84 = vld [vmem:[#allocation5 + $0x5c] sm:$0xf]
    %v85 = vld [vmem:[#allocation5 + $0x60] sm:$0xf]
    %v86 = vld [vmem:[#allocation5 + $0x64] sm:$0xf]
    %v87 = vld [vmem:[#allocation5 + $0x68] sm:$0xf]
    %v88 = vld [vmem:[#allocation5 + $0x6c] sm:$0xf]
    %v89 = vld [vmem:[#allocation5 + $0x70] sm:$0xf]
    %v90 = vld [vmem:[#allocation5 + $0x74] sm:$0xf]
    %v91 = vld [vmem:[#allocation5 + $0x78] sm:$0xf]
    %v92 = vld [vmem:[#allocation5 + $0x7c] sm:$0xf]
    %v93 = vld [vmem:[#allocation5 + $0x80] sm:$0xf]
    %v94 = vld [vmem:[#allocation5 + $0x84] sm:$0xf]
    %v95 = vld [vmem:[#allocation5 + $0x88] sm:$0xf]
    %v96 = vld [vmem:[#allocation5 + $0x8c] sm:$0xf]
    %v97 = vld [vmem:[#allocation5 + $0x90] sm:$0xf]
    %v98 = vld [vmem:[#allocation5 + $0x94] sm:$0xf]
    %v99 = vld [vmem:[#allocation5 + $0x98] sm:$0xf]
    %v100 = vld [vmem:[#allocation5 + $0x9c] sm:$0xf]
    %v101 = vld [vmem:[#allocation5 + $0xa0] sm:$0xf]
    %v102 = vld [vmem:[#allocation5 + $0xa4] sm:$0xf]
    %v103 = vld [vmem:[#allocation5 + $0xa8] sm:$0xf]
    %v104 = vld [vmem:[#allocation5 + $0xac] sm:$0xf]
    %v105 = vld [vmem:[#allocation5 + $0xb0] sm:$0xf]
    %v106 = vld [vmem:[#allocation5 + $0xb4] sm:$0xf]
    %v107 = vld [vmem:[#allocation5 + $0xb8] sm:$0xf]
    %v108 = vld [vmem:[#allocation5 + $0xbc] sm:$0xf]
    %v109 = vld [vmem:[#allocation5 + $0xc0] sm:$0xf]
    %v110 = vld [vmem:[#allocation5 + $0xc4] sm:$0xf]
    %v111 = vld [vmem:[#allocation5 + $0xc8] sm:$0xf]
    %v112 = vld [vmem:[#allocation5 + $0xcc] sm:$0xf]
    %v113 = vld [vmem:[#allocation5 + $0xd0] sm:$0xf]
    %v114 = vld [vmem:[#allocation5 + $0xd4] sm:$0xf]
    %v115 = vld [vmem:[#allocation5 + $0xd8] sm:$0xf]
    %v116 = vld [vmem:[#allocation5 + $0xdc] sm:$0xf]
    %v117 = vld [vmem:[#allocation5 + $0xe0] sm:$0xf]
    %v118 = vld [vmem:[#allocation5 + $0xe4] sm:$0xf]
    %v119 = vld [vmem:[#allocation5 + $0xe8] sm:$0xf]
    %v120 = vld [vmem:[#allocation5 + $0xec] sm:$0xf]
    %v121 = vld [vmem:[#allocation5 + $0xf0] sm:$0xf]
    %v122 = vld [vmem:[#allocation5 + $0xf4] sm:$0xf]
    %v123 = vld [vmem:[#allocation5 + $0xf8] sm:$0xf]
    %v124 = vld [vmem:[#allocation5 + $0xfc] sm:$0xf]
    %v125 = vld [vmem:[#allocation5 + $0x100] sm:$0xf]
    %v126 = vld [vmem:[#allocation5 + $0x104] sm:$0xf]
    %v127 = vld [vmem:[#allocation5 + $0x108] sm:$0xf]
    %v128 = vld [vmem:[#allocation5 + $0x10c] sm:$0xf]
    %v129 = vld [vmem:[#allocation5 + $0x110] sm:$0xf]
    %v130 = vld [vmem:[#allocation5 + $0x114] sm:$0xf]
    %v131 = vld [vmem:[#allocation5 + $0x118] sm:$0xf]
    %v132 = vld [vmem:[#allocation5 + $0x11c] sm:$0xf]
    %v145 = vunpack.c.l.b16 %v49
    %v146 = vunpack.c.h.b16 %v49
    %v147 = vunpack.c.l.b16 %v50
    %v148 = vunpack.c.h.b16 %v50
    %v149 = vunpack.c.l.b16 %v51
    %v150 = vunpack.c.l.b16 %v52
    %v151 = vunpack.c.h.b16 %v52
    %v152 = vunpack.c.l.b16 %v53
    %v153 = vunpack.c.h.b16 %v53
    %v154 = vunpack.c.l.b16 %v54
    %v155 = vunpack.c.l.b16 %v55
    %v156 = vunpack.c.h.b16 %v55
    %v157 = vunpack.c.l.b16 %v56
    %v158 = vunpack.c.h.b16 %v56
    %v159 = vunpack.c.l.b16 %v57
    %v160 = vunpack.c.l.b16 %v58
    %v161 = vunpack.c.h.b16 %v58
    %v162 = vunpack.c.l.b16 %v59
    %v163 = vunpack.c.h.b16 %v59
    %v164 = vunpack.c.l.b16 %v60
    %v165 = vpack.c.b16 %v150, %v145
    %v166 = vpack.c.b16 %v151, %v146
    %v167 = vpack.c.b16 %v152, %v147
    %v168 = vpack.c.b16 %v153, %v148
    %v169 = vpack.c.b16 %v154, %v149
    %v170 = vpack.c.b16 %v160, %v155
    %v171 = vpack.c.b16 %v161, %v156
    %v172 = vpack.c.b16 %v162, %v157
    %v173 = vpack.c.b16 %v163, %v158
    %v174 = vpack.c.b16 %v164, %v159
    %v255 = vunpack.c.l.b16 %v61
    %v256 = vunpack.c.l.b16 %v62
    %v257 = vunpack.c.l.b16 %v63
    %v258 = vunpack.c.l.b16 %v64
    %v259 = vunpack.c.l.b16 %v65
    %v260 = vunpack.c.l.b16 %v66
    %v261 = vunpack.c.l.b16 %v67
    %v262 = vunpack.c.l.b16 %v68
    %v263 = vunpack.c.l.b16 %v69
    %v264 = vunpack.c.l.b16 %v70
    %v265 = vunpack.c.l.b16 %v71
    %v266 = vunpack.c.l.b16 %v72
    %v267 = vunpack.c.l.b16 %v73
    %v268 = vunpack.c.l.b16 %v74
    %v269 = vunpack.c.l.b16 %v75
    %v270 = vunpack.c.l.b16 %v76
    %v271 = vunpack.c.l.b16 %v77
    %v272 = vunpack.c.l.b16 %v78
    %v273 = vunpack.c.l.b16 %v79
    %v274 = vunpack.c.l.b16 %v80
    %v275 = vunpack.c.l.b16 %v81
    %v276 = vunpack.c.l.b16 %v82
    %v277 = vunpack.c.l.b16 %v83
    %v278 = vunpack.c.l.b16 %v84
    %v279 = vunpack.c.l.b16 %v85
    %v280 = vunpack.c.l.b16 %v86
    %v281 = vunpack.c.l.b16 %v87
    %v282 = vunpack.c.l.b16 %v88
    %v283 = vunpack.c.l.b16 %v89
    %v284 = vunpack.c.l.b16 %v90
    %v285 = vunpack.c.l.b16 %v91
    %v286 = vunpack.c.l.b16 %v92
    %v287 = vunpack.c.l.b16 %v93
    %v288 = vunpack.c.l.b16 %v94
    %v289 = vunpack.c.l.b16 %v95
    %v290 = vunpack.c.l.b16 %v96
    %v291 = vunpack.c.l.b16 %v97
    %v292 = vunpack.c.l.b16 %v98
    %v293 = vunpack.c.l.b16 %v99
    %v294 = vunpack.c.l.b16 %v100
    %v295 = vunpack.c.l.b16 %v101
    %v296 = vunpack.c.l.b16 %v102
    %v297 = vunpack.c.l.b16 %v103
    %v298 = vunpack.c.l.b16 %v104
    %v299 = vunpack.c.l.b16 %v105
    %v300 = vunpack.c.l.b16 %v106
    %v301 = vunpack.c.l.b16 %v107
    %v302 = vunpack.c.l.b16 %v108
    %v303 = vunpack.c.l.b16 %v109
    %v304 = vunpack.c.l.b16 %v110
    %v305 = vunpack.c.l.b16 %v111
    %v306 = vunpack.c.l.b16 %v112
    %v307 = vunpack.c.l.b16 %v113
    %v308 = vunpack.c.l.b16 %v114
    %v309 = vunpack.c.l.b16 %v115
    %v310 = vunpack.c.l.b16 %v116
    %v311 = vunpack.c.l.b16 %v117
    %v312 = vunpack.c.l.b16 %v118
    %v313 = vunpack.c.l.b16 %v119
    %v314 = vunpack.c.l.b16 %v120
    %v315 = vunpack.c.l.b16 %v121
    %v316 = vunpack.c.l.b16 %v122
    %v317 = vunpack.c.l.b16 %v123
    %v318 = vunpack.c.l.b16 %v124
    %v319 = vunpack.c.l.b16 %v125
    %v320 = vunpack.c.l.b16 %v126
    %v321 = vunpack.c.l.b16 %v127
    %v322 = vunpack.c.l.b16 %v128
    %v323 = vunpack.c.l.b16 %v129
    %v324 = vunpack.c.l.b16 %v130
    %v325 = vunpack.c.l.b16 %v131
    %v326 = vunpack.c.l.b16 %v132
    %v327 = vpack.c.b16 %v256, %v255
    %v328 = vpack.c.b16 %v258, %v257
    %v329 = vpack.c.b16 %v260, %v259
    %v330 = vpack.c.b16 %v262, %v261
    %v331 = vpack.c.b16 %v264, %v263
    %v332 = vpack.c.b16 %v266, %v265
    %v333 = vpack.c.b16 %v268, %v267
    %v334 = vpack.c.b16 %v270, %v269
    %v335 = vpack.c.b16 %v272, %v271
    %v336 = vpack.c.b16 %v274, %v273
    %v337 = vpack.c.b16 %v276, %v275
    %v338 = vpack.c.b16 %v278, %v277
    %v339 = vpack.c.b16 %v280, %v279
    %v340 = vpack.c.b16 %v282, %v281
    %v341 = vpack.c.b16 %v284, %v283
    %v342 = vpack.c.b16 %v286, %v285
    %v343 = vpack.c.b16 %v288, %v287
    %v344 = vpack.c.b16 %v290, %v289
    %v345 = vpack.c.b16 %v292, %v291
    %v346 = vpack.c.b16 %v294, %v293
    %v347 = vpack.c.b16 %v296, %v295
    %v348 = vpack.c.b16 %v298, %v297
    %v349 = vpack.c.b16 %v300, %v299
    %v350 = vpack.c.b16 %v302, %v301
    %v351 = vpack.c.b16 %v304, %v303
    %v352 = vpack.c.b16 %v306, %v305
    %v353 = vpack.c.b16 %v308, %v307
    %v354 = vpack.c.b16 %v310, %v309
    %v355 = vpack.c.b16 %v312, %v311
    %v356 = vpack.c.b16 %v314, %v313
    %v357 = vpack.c.b16 %v316, %v315
    %v358 = vpack.c.b16 %v318, %v317
    %v359 = vpack.c.b16 %v320, %v319
    %v360 = vpack.c.b16 %v322, %v321
    %v361 = vpack.c.b16 %v324, %v323
    %v362 = vpack.c.b16 %v326, %v325
    %vm399 = vcmask 523264
    %v401 = vsel %vm399, %v169, 0
    %v404 = vsel %vm399, %v174, 0
    %406 = vmatpush.bf16.msra.mxu0 %v334
    %407 = vmatpush.bf16.msra.mxu0 %v333
    %408 = vmatpush.bf16.msra.mxu0 %v332
    %409 = vmatpush.bf16.msra.mxu0 %v331
    %410 = vmatpush.bf16.msra.mxu0 %v330
    %411 = vmatpush.bf16.msra.mxu0 %v329
    %412 = vmatpush.bf16.msra.mxu0 %v328
    %413 = vmatpush.bf16.msra.mxu0 %v327
    %414 = vmatmul.bf16.gmra.mxu0 %v165
    %v415 = vpop.f32.mrf.mxu0
    %v416 = vadd.f32 0.0, %v415
    %v417 = vpop.f32.mrf.mxu0
    %v418 = vadd.f32 0.0, %v417
    %419 = vmatmul.bf16.gmra.mxu0 %v170
    %v420 = vpop.f32.mrf.mxu0
    %v421 = vadd.f32 0.0, %v420
    %v422 = vpop.f32.mrf.mxu0
    %v423 = vadd.f32 0.0, %v422
    %424 = vdwg.mxu0
    %425 = vmatpush.bf16.msra.mxu0 %v342
    %426 = vmatpush.bf16.msra.mxu0 %v341
    %427 = vmatpush.bf16.msra.mxu0 %v340
    %428 = vmatpush.bf16.msra.mxu0 %v339
    %429 = vmatpush.bf16.msra.mxu0 %v338
    %430 = vmatpush.bf16.msra.mxu0 %v337
    %431 = vmatpush.bf16.msra.mxu0 %v336
    %432 = vmatpush.bf16.msra.mxu0 %v335
    %433 = vmatmul.bf16.gmra.mxu0 %v166
    %v434 = vpop.f32.mrf.mxu0
    %v435 = vadd.f32 %v416, %v434
    %v436 = vpop.f32.mrf.mxu0
    %v437 = vadd.f32 %v418, %v436
    %438 = vmatmul.bf16.gmra.mxu0 %v171
    %v439 = vpop.f32.mrf.mxu0
    %v440 = vadd.f32 %v421, %v439
    %v441 = vpop.f32.mrf.mxu0
    %v442 = vadd.f32 %v423, %v441
    %443 = vdwg.mxu0
    %444 = vmatpush.bf16.msra.mxu0 %v350
    %445 = vmatpush.bf16.msra.mxu0 %v349
    %446 = vmatpush.bf16.msra.mxu0 %v348
    %447 = vmatpush.bf16.msra.mxu0 %v347
    %448 = vmatpush.bf16.msra.mxu0 %v346
    %449 = vmatpush.bf16.msra.mxu0 %v345
    %450 = vmatpush.bf16.msra.mxu0 %v344
    %451 = vmatpush.bf16.msra.mxu0 %v343
    %452 = vmatmul.bf16.gmra.mxu0 %v167
    %v453 = vpop.f32.mrf.mxu0
    %v454 = vadd.f32 %v435, %v453
    %v455 = vpop.f32.mrf.mxu0
    %v456 = vadd.f32 %v437, %v455
    %457 = vmatmul.bf16.gmra.mxu0 %v172
    %v458 = vpop.f32.mrf.mxu0
    %v459 = vadd.f32 %v440, %v458
    %v460 = vpop.f32.mrf.mxu0
    %v461 = vadd.f32 %v442, %v460
    %462 = vdwg.mxu0
    %463 = vmatpush.bf16.msra.mxu0 %v358
    %464 = vmatpush.bf16.msra.mxu0 %v357
    %465 = vmatpush.bf16.msra.mxu0 %v356
    %466 = vmatpush.bf16.msra.mxu0 %v355
    %467 = vmatpush.bf16.msra.mxu0 %v354
    %468 = vmatpush.bf16.msra.mxu0 %v353
    %469 = vmatpush.bf16.msra.mxu0 %v352
    %470 = vmatpush.bf16.msra.mxu0 %v351
    %471 = vmatmul.bf16.gmra.mxu0 %v168
    %v472 = vpop.f32.mrf.mxu0
    %v473 = vadd.f32 %v454, %v472
    %v474 = vpop.f32.mrf.mxu0
    %v475 = vadd.f32 %v456, %v474
    %476 = vmatmul.bf16.gmra.mxu0 %v173
    %v477 = vpop.f32.mrf.mxu0
    %v478 = vadd.f32 %v459, %v477
    %v479 = vpop.f32.mrf.mxu0
    %v480 = vadd.f32 %v461, %v479
    %481 = vdwg.mxu0
    %482 = vmatpush.bf16.msra.mxu0 0
    %483 = vmatpush.bf16.msra.mxu0 0
    %484 = vmatpush.bf16.msra.mxu0 0
    %485 = vmatpush.bf16.msra.mxu0 0
    %486 = vmatpush.bf16.msra.mxu0 %v362
    %487 = vmatpush.bf16.msra.mxu0 %v361
    %488 = vmatpush.bf16.msra.mxu0 %v360
    %489 = vmatpush.bf16.msra.mxu0 %v359
    %490 = vmatmul.bf16.gmra.mxu0 %v401
    %v491 = vpop.f32.mrf.mxu0
    %v492 = vadd.f32 %v473, %v491
    %v493 = vpop.f32.mrf.mxu0
    %v494 = vadd.f32 %v475, %v493
    %495 = vmatmul.bf16.gmra.mxu0 %v404
    %v496 = vpop.f32.mrf.mxu0
    %v497 = vadd.f32 %v478, %v496
    %v498 = vpop.f32.mrf.mxu0
    %v499 = vadd.f32 %v480, %v498
    %500 = vdwg.mxu0
    %501 = vst [vmem:[#allocation7] sm:$0xff] %v492
    %502 = vst [vmem:[#allocation7 + $0x8] sm:$0xff] %v494
    %503 = vst [vmem:[#allocation7 + $0x10] sm:$0xff] %v497
    %504 = vst [vmem:[#allocation7 + $0x18] sm:$0xff] %v499
    %v505 = vadd.f32 %v492, %v494
    %v506 = vadd.f32 %v505, %v497
    %v507 = vadd.f32 %v506, %v499
    %v508 = vrot.slane %v507, 4
    %v509 = vadd.f32 %v507, %v508
    %v510 = vrot.slane %v509, 2
    %v511 = vadd.f32 %v509, %v510
    %v512 = vrot.slane %v511, 1
    %v513 = vadd.f32 %v511, %v512
    %v514 = vmul.f32 %v513, 0.125
    %v515 = vmul.f32 %v492, %v492
    %v516 = vmul.f32 %v494, %v494
    %v517 = vmul.f32 %v497, %v497
    %v518 = vmul.f32 %v499, %v499
    %v519 = vadd.f32 %v515, %v516
    %v520 = vadd.f32 %v519, %v517
    %v521 = vadd.f32 %v520, %v518
    %v522 = vrot.slane %v521, 4
    %v523 = vadd.f32 %v521, %v522
    %v524 = vrot.slane %v523, 2
    %v525 = vadd.f32 %v523, %v524
    %v526 = vrot.slane %v525, 1
    %v527 = vadd.f32 %v525, %v526
    %v528 = vmul.f32 %v527, 0.125
    %529 = vst [vmem:[#allocation8] sm:$0xff] %v514
    %530 = vst [vmem:[#allocation10] sm:$0xff] %v528
    // Predicated region
    $region18: #{tpu_custom_call.1} parent=1 // pred_check
      _
    $region19: #{tpu_custom_call.1} parent=1 // pred_check_branch
      %532 = sbr.rel (0) target = $region21
    $region20: #{tpu_custom_call.1} parent=1 // pred_region
      %534 = vsyncadd [#allocation4], 0
      %s535 = sshll.u32 [#allocation7], 4
      %s536 = int_to_ptr.vmem [resolvable:$true] %s535
      %s537 = sshll.u32 %s2, 4
      %s538 = int_to_ptr.hbm [resolvable:$true] %s537
      %543 = dma.vmem_to_hbm [thread:$0]  %s536, 512, %s538, [#allocation4], 128, 128, 8
    $region21: #{tpu_custom_call.1} parent=1 // pred_fallthru
      _
    // Predicated region
    $region22: #{tpu_custom_call.1} parent=1 // pred_check
      _
    $region23: #{tpu_custom_call.1} parent=1 // pred_check_branch
      %545 = sbr.rel (0) target = $region25
    $region24: #{tpu_custom_call.1} parent=1 // pred_region
      %547 = vsyncadd [#allocation9], 0
      %s549 = sshll.u32 [#allocation8], 4
      %s550 = int_to_ptr.vmem [resolvable:$true] %s549
      %s551 = sshll.u32 %s3, 4
      %s552 = int_to_ptr.hbm [resolvable:$true] %s551
      %554 = dma.vmem_to_hbm [thread:$0]  %s550, 128, %s552, [#allocation9]
    $region25: #{tpu_custom_call.1} parent=1 // pred_fallthru
      _
    // Predicated region
    $region26: #{tpu_custom_call.1} parent=1 // pred_check
      _
    $region27: #{tpu_custom_call.1} parent=1 // pred_check_branch
      %556 = sbr.rel (0) target = $region29
    $region28: #{tpu_custom_call.1} parent=1 // pred_region
      %558 = vsyncadd [#allocation9], 0
      %s560 = sshll.u32 [#allocation10], 4
      %s561 = int_to_ptr.vmem [resolvable:$true] %s560
      %s562 = sshll.u32 %s4, 4
      %s563 = int_to_ptr.hbm [resolvable:$true] %s562
      %565 = dma.vmem_to_hbm [thread:$0]  %s561, 128, %s563, [#allocation9]
    $region29: #{tpu_custom_call.1} parent=1 // pred_fallthru
      _
    // Predicated region
    $region30: #{tpu_custom_call.1} parent=1 // pred_check
      _
    $region31: #{tpu_custom_call.1} parent=1 // pred_check_branch
      %567 = sbr.rel (0) target = $region33
    $region32: #{tpu_custom_call.1} parent=1 // pred_region
      %569 = dma.done [#allocation4], 512
    $region33: #{tpu_custom_call.1} parent=1 // pred_fallthru
      _
    // Predicated region
    $region34: #{tpu_custom_call.1} parent=1 // pred_check
      _
    $region35: #{tpu_custom_call.1} parent=1 // pred_check_branch
      %571 = sbr.rel (0) target = $region37
    $region36: #{tpu_custom_call.1} parent=1 // pred_region
      %573 = dma.done [#allocation9], 128
    $region37: #{tpu_custom_call.1} parent=1 // pred_fallthru
      _
    // Predicated region
    $region38: #{tpu_custom_call.1} parent=1 // pred_check
      _
    $region39: #{tpu_custom_call.1} parent=1 // pred_check_branch
      %575 = sbr.rel (0) target = $region41
    $region40: #{tpu_custom_call.1} parent=1 // pred_region
      %577 = dma.done [#allocation9], 128
    $region41: #{tpu_custom_call.1} parent=1 // pred_fallthru
      _
    %578 = vsyncpa [#allocation3], 1
    %579 = vsyncpa [#allocation6], 1
    %580 = vsyncpa [#allocation4], 1
    %581 = vsyncpa [#allocation9], 1

</llo_original>
